<compile_context>
chip_gen: v5e
topology: v5e:2x2
jax: 0.10.0
libtpu: 0.0.40
codegen_flags: <defaults>
</compile_context>

<pallas_src>
import functools

import jax
import jax.numpy as jnp
import numpy as np
from jax.experimental import pallas as pl
from jax.experimental.pallas import tpu as pltpu

_LANE = 128
_SUBLANE = 8
_MAX_RESIDENT_T = 32        # beyond this, the time axis moves into the grid
_MIN_BLOCKS = 8             # target block count for DMA/compute pipelining
_MIN_BLOCK_HBM = 1 << 20    # don't shrink blocks below ~1 MiB HBM traffic
_MAX_BLOCK_HBM = 16 << 20   # bigger blocks buy nothing and bloat unrolled code


def _cdiv(a, b):
    return -(-a // b)


def _rup(v, m):
    return ((v + m - 1) // m) * m


_VMEM_CAP = None


def _vmem_capacity_bytes():
    """Physical VMEM per TensorCore (v5e/v6e: 128 MiB, v7x: 64 MiB)."""
    global _VMEM_CAP
    if _VMEM_CAP is None:
        cap = None
        try:
            cap = getattr(pltpu.get_tpu_info(), "vmem_capacity_bytes", None)
        except Exception:
            cap = None
        _VMEM_CAP = int(cap) if cap else 64 * 1024 * 1024   # v7x-safe fallback
    return _VMEM_CAP


def _budgets():
    cap = _vmem_capacity_bytes()
    budget = int(cap * 0.60)   # tile-sizing budget (double buffers + scratch)
    limit = int(cap * 0.90)    # scoped-VMEM limit handed to the compiler
    return budget, limit


# --------------------------------------------------------------------------
# Kernels
# --------------------------------------------------------------------------
def _spike_kernel_resident(ti_ref, to_ref, x_ref, o_ref, mem_ref):
    """Whole time recurrence inside one grid step.

    ti_ref, to_ref : (T,) f32 SMEM, already thresh[min(t, len-1)] * T
    x_ref          : (tb, T, tr, 128) f32 VMEM
    o_ref          : (tb, T, tr, 128) VMEM (f32 or bf16)
    mem_ref        : (tb, tr, 128) f32 VMEM scratch (membrane potential)
    """
    T = x_ref.shape[1]
    # t == 0: membrane starts at 0, so mem == x[:, 0] (init folded into step 0).
    mem = x_ref[:, 0]
    spike = (mem >= ti_ref[0]).astype(jnp.float32) * to_ref[0]
    o_ref[:, 0] = spike.astype(o_ref.dtype)
    mem_ref[...] = mem - spike
    # T is static and small on this path -> full unroll for best scheduling.
    for t in range(1, T):
        mem = mem_ref[...] + x_ref[:, t]
        spike = (mem >= ti_ref[t]).astype(jnp.float32) * to_ref[t]
        o_ref[:, t] = spike.astype(o_ref.dtype)
        mem_ref[...] = mem - spike


def _spike_kernel_timegrid(ti_ref, to_ref, x_ref, o_ref, mem_ref):
    """One (batch-tile, feature-tile, timestep) per grid step.

    T is the innermost 'arbitrary' grid axis; the membrane persists in a VMEM
    scratch across it and is re-initialized at t == 0 of every tile.

    x_ref, o_ref : (tb, td) VMEM (time dim squeezed out of the block)
    mem_ref      : (tb, td) f32 VMEM scratch
    """
    t = pl.program_id(2)

    @pl.when(t == 0)
    def _():
        mem_ref[...] = jnp.zeros_like(mem_ref)

    mem = mem_ref[...] + x_ref[...]
    spike = (mem >= ti_ref[t]).astype(jnp.float32) * to_ref[t]
    o_ref[...] = spike.astype(o_ref.dtype)
    mem_ref[...] = mem - spike


# --------------------------------------------------------------------------
# Tile selection
# --------------------------------------------------------------------------
def _choose_tiles_resident(B, T, R, budget):
    """(tb, tr) for blocks of shape (tb, T, tr, 128).

    Priorities: fit the VMEM budget ((4T+1)*tb*tr*512 bytes), keep tr = R as
    long as possible (fully contiguous DMA) by shrinking tb first, cap per-
    block HBM traffic, and provide >= _MIN_BLOCKS evenly-sized blocks for
    pipelining / v7x megacore without dropping below ~1 MiB per block.
    """
    per_unit_vmem = (4 * T + 1) * 512          # VMEM bytes per tb*tr unit
    per_unit_hbm = 2 * T * 512                 # HBM bytes per tb*tr unit
    max_units = max(_SUBLANE,
                    min(budget // per_unit_vmem, _MAX_BLOCK_HBM // per_unit_hbm))
    min_units = max(_SUBLANE, _MIN_BLOCK_HBM // per_unit_hbm)

    def units(tb, tr):
        return tb * tr

    def nblocks(tb, tr):
        return _cdiv(B, tb) * _cdiv(R, tr)

    tb, tr = B, R
    # Fit the budget / HBM cap: shrink the batch tile first (keeps tr = R ->
    # one long contiguous HBM region per batch row), then the feature tile.
    while tb > 1 and units(tb, tr) > max_units:
        tb = (tb + 1) // 2
    while tr > _SUBLANE and units(tb, tr) > max_units:
        tr = max(_SUBLANE, _rup(_cdiv(tr, 2), _SUBLANE))
    # Enough blocks for pipelining and an even v7x two-core split.
    while (tb > 1 and nblocks(tb, tr) < _MIN_BLOCKS
           and (units((tb + 1) // 2, tr) >= min_units or nblocks(tb, tr) < 2)):
        tb = (tb + 1) // 2
    while (tr > _SUBLANE and nblocks(tb, tr) < _MIN_BLOCKS
           and (units(tb, max(_SUBLANE, _rup(_cdiv(tr, 2), _SUBLANE))) >= min_units
                or nblocks(tb, tr) < 2)):
        tr = max(_SUBLANE, _rup(_cdiv(tr, 2), _SUBLANE))
    return tb, tr


def _choose_tiles_timegrid(B, T, D, budget):
    """(tb, td) for blocks of shape (tb, 1, td) (time dim squeezed).

    VMEM per step = 5 * tb * td * 4 bytes (2x in + 2x out buffers + scratch).
    td stays a multiple of 128 (or the full D) so stores stay lane-dense; tb
    stays a multiple of 8 (or the full B).  Shrink tb first: a full-width row
    (td = D) is one contiguous D*4-byte HBM segment per (b, t).
    """
    def vmem(tb, td):
        return 5 * tb * td * 4

    def shrink_tb(tb):
        return tb if tb <= _SUBLANE else max(_SUBLANE, _rup(_cdiv(tb, 2), _SUBLANE))

    def shrink_td(td):
        return td if td <= _LANE else max(_LANE, _rup(_cdiv(td, 2), _LANE))

    tb, td = B, D
    while vmem(tb, td) > budget and shrink_tb(tb) < tb:
        tb = shrink_tb(tb)
    while vmem(tb, td) > budget and shrink_td(td) < td:
        td = shrink_td(td)

    # Give v7x's two TensorCores at least two parallel (b, d) blocks when the
    # problem can be split; T (the 'arbitrary' axis) already provides the
    # sequential steps that drive DMA/compute pipelining.
    if _cdiv(B, tb) * _cdiv(D, td) < 2:
        if D >= 2 * _LANE:
            td = _rup(_cdiv(D, 2), _LANE)
        elif B >= 2 * _SUBLANE:
            tb = max(_SUBLANE, _rup(_cdiv(B, 2), _SUBLANE))
    return tb, td


# --------------------------------------------------------------------------
# pallas_call wrappers
# --------------------------------------------------------------------------
def _call_time_resident(x_btd, ti_t, to_t, out_dtype, budget, vmem_limit):
    B, T, D = x_btd.shape
    R = D // _LANE
    x4 = x_btd.reshape(B, T, R, _LANE)          # free, contiguous reshape
    tb, tr = _choose_tiles_resident(B, T, R, budget)
    grid = (_cdiv(B, tb), _cdiv(R, tr))
    out = pl.pallas_call(
        _spike_kernel_resident,
        out_shape=jax.ShapeDtypeStruct((B, T, R, _LANE), out_dtype),
        grid=grid,
        in_specs=[
            pl.BlockSpec(memory_space=pltpu.MemorySpace.SMEM),    # ti (T,)
            pl.BlockSpec(memory_space=pltpu.MemorySpace.SMEM),    # to (T,)
            pl.BlockSpec((tb, T, tr, _LANE), lambda b, r: (b, 0, r, 0)),
        ],
        out_specs=pl.BlockSpec((tb, T, tr, _LANE), lambda b, r: (b, 0, r, 0)),
        scratch_shapes=[pltpu.VMEM((tb, tr, _LANE), jnp.float32)],
        compiler_params=pltpu.CompilerParams(
            dimension_semantics=("parallel", "parallel"),
            vmem_limit_bytes=vmem_limit,
        ),
    )(ti_t, to_t, x4)
    return out.reshape(B, T, D)


def _call_time_grid(x_btd, ti_t, to_t, out_dtype, budget, vmem_limit):
    B, T, D = x_btd.shape
    tb, td = _choose_tiles_timegrid(B, T, D, budget)
    grid = (_cdiv(B, tb), _cdiv(D, td), T)
    return pl.pallas_call(
        _spike_kernel_timegrid,
        out_shape=jax.ShapeDtypeStruct((B, T, D), out_dtype),
        grid=grid,
        in_specs=[
            pl.BlockSpec(memory_space=pltpu.MemorySpace.SMEM),    # ti (T,)
            pl.BlockSpec(memory_space=pltpu.MemorySpace.SMEM),    # to (T,)
            pl.BlockSpec((tb, None, td), lambda b, d, t: (b, t, d)),
        ],
        out_specs=pl.BlockSpec((tb, None, td), lambda b, d, t: (b, t, d)),
        scratch_shapes=[pltpu.VMEM((tb, td), jnp.float32)],
        compiler_params=pltpu.CompilerParams(
            dimension_semantics=("parallel", "parallel", "arbitrary"),
            vmem_limit_bytes=vmem_limit,
        ),
    )(ti_t, to_t, x_btd)


@functools.partial(jax.jit, static_argnames=("out_dtype",))
def _spike_core(x, ti_t, to_t, out_dtype=jnp.float32):
    shape = x.shape
    B, T = shape[0], shape[1]
    D = int(np.prod(shape[2:])) if len(shape) > 2 else 1
    x_btd = x.reshape(B, T, D)                  # free, contiguous reshape
    budget, limit = _budgets()
    if D % _LANE == 0 and D >= _LANE and T <= _MAX_RESIDENT_T:
        out = _call_time_resident(x_btd, ti_t, to_t, out_dtype, budget, limit)
    else:
        out = _call_time_grid(x_btd, ti_t, to_t, out_dtype, budget, limit)
    return out.reshape(shape)


def spike_layer_forward(x, thresh_inner, thresh_outer, t=None,
                        out_dtype=jnp.float32):
    """JAX/Pallas equivalent of SPIKE_layer.forward(input, t).

    `t` is unused, exactly as in the PyTorch reference (it is shadowed by the
    loop variable).  `out_dtype` optionally emits bf16 spikes (halves the
    writeback HBM traffic); the default float32 matches the reference exactly.
    """
    x = jnp.asarray(x, jnp.float32)
    T = x.shape[1]
    ti = np.asarray(thresh_inner, dtype=np.float32).reshape(-1)
    to = np.asarray(thresh_outer, dtype=np.float32).reshape(-1)
    # PyTorch: t_idx = min(t, len(thresh_inner) - 1) indexes BOTH thresholds;
    # SpikeAct's `const` folds in as a factor of T.
    idx = np.minimum(np.arange(T), ti.shape[0] - 1)
    ti_t = jnp.asarray(ti[idx] * np.float32(T))
    to_t = jnp.asarray(to[idx] * np.float32(T))
    return _spike_core(x, ti_t, to_t, out_dtype=out_dtype)


def spike_layer_ref(x, thresh_inner, thresh_outer):
    """Pure-JAX reference mirroring the PyTorch loop, for validation."""
    x = jnp.asarray(x, jnp.float32)
    T = x.shape[1]
    ti = np.asarray(thresh_inner, dtype=np.float32).reshape(-1)
    to = np.asarray(thresh_outer, dtype=np.float32).reshape(-1)
    mem = jnp.zeros((x.shape[0],) + x.shape[2:], jnp.float32)
    outs = []
    for t in range(T):
        mem = mem + x[:, t]
        t_idx = min(t, ti.shape[0] - 1)
        th_i = np.float32(ti[t_idx] * np.float32(T))
        th_o = np.float32(to[t_idx] * np.float32(T))
        spike = (mem >= th_i).astype(jnp.float32) * th_o
        mem = mem - spike
        outs.append(spike)
    return jnp.stack(outs, axis=1)


if __name__ == "__main__":
    thresh_inner, thresh_outer = 0.25, 0.5

    # 1) D % 128 == 0 -> time-resident path (whole recurrence in one grid step).
    B, T, C, H, W = 2, 8, 4, 16, 16
    x = jax.random.normal(jax.random.PRNGKey(0), (B, T, C, H, W),
                          dtype=jnp.float32)
    out = jax.block_until_ready(
        spike_layer_forward(x, thresh_inner, thresh_outer, t=0))
    assert out.shape == (B, T, C, H, W), out.shape
    assert out.dtype == jnp.float32
    ref = spike_layer_ref(x, thresh_inner, thresh_outer)
    np.testing.assert_allclose(np.asarray(out), np.asarray(ref), rtol=0, atol=0)

    # 2) D % 128 != 0 -> time-in-grid path (no host-side pad/slice HBM passes).
    x2 = jax.random.normal(jax.random.PRNGKey(1), (2, 8, 3, 10, 10),
                           dtype=jnp.float32)
    out2 = jax.block_until_ready(
        spike_layer_forward(x2, thresh_inner, thresh_outer, t=0))
    ref2 = spike_layer_ref(x2, thresh_inner, thresh_outer)
    np.testing.assert_allclose(np.asarray(out2), np.asarray(ref2), rtol=0, atol=0)

    print("KERNEL_OK")
</pallas_src>

<mosaic_0001>
module attributes {stable_mosaic.version = 11 : i64} {
  func.func @_spike_kernel_resident(%arg0: i32, %arg1: i32, %arg2: memref<8xf32, #tpu.memory_space<smem>>, %arg3: memref<8xf32, #tpu.memory_space<smem>>, %arg4: memref<1x8x8x128xf32, #tpu.memory_space<vmem>>, %arg5: memref<1x8x8x128xf32, #tpu.memory_space<vmem>>, %arg6: memref<1x8x128xf32, #tpu.memory_space<vmem>>) attributes {dimension_semantics = [#tpu.dimension_semantics<parallel>, #tpu.dimension_semantics<parallel>], iteration_bounds = array<i64: 2, 1>, scalar_prefetch = 0 : i64, scratch_operands = 1 : i64, tpu.core_type = #tpu.core_type<tc>, window_params = [{transform_indices = @transform_0, window_bounds = array<i64: 8>}, {transform_indices = @transform_1, window_bounds = array<i64: 8>}, {transform_indices = @transform_2, window_bounds = array<i64: 1, 8, 8, 128>}, {transform_indices = @transform_3, window_bounds = array<i64: 1, 8, 8, 128>}]} {
    %c0 = arith.constant 0 : index
    %c0_0 = arith.constant 0 : index
    %c0_1 = arith.constant 0 : index
    %c0_2 = arith.constant 0 : index
    %0 = vector.load %arg4[%c0, %c0_0, %c0_1, %c0_2] : memref<1x8x8x128xf32, #tpu.memory_space<vmem>>, vector<1x1x8x128xf32>
    %1 = vector.shape_cast %0 : vector<1x1x8x128xf32> to vector<1x8x128xf32>
    %c0_3 = arith.constant 0 : index
    %2 = memref.load %arg2[%c0_3] : memref<8xf32, #tpu.memory_space<smem>>
    %3 = vector.broadcast %2 : f32 to vector<1x8x128xf32>
    %4 = arith.cmpf oge, %1, %3 : vector<1x8x128xf32>
    %5 = arith.extui %4 : vector<1x8x128xi1> to vector<1x8x128xi32>
    %6 = arith.sitofp %5 : vector<1x8x128xi32> to vector<1x8x128xf32>
    %c0_4 = arith.constant 0 : index
    %7 = memref.load %arg3[%c0_4] : memref<8xf32, #tpu.memory_space<smem>>
    %8 = vector.broadcast %7 : f32 to vector<1x8x128xf32>
    %9 = arith.mulf %6, %8 : vector<1x8x128xf32>
    %c0_5 = arith.constant 0 : index
    %c0_6 = arith.constant 0 : index
    %c0_7 = arith.constant 0 : index
    %c0_8 = arith.constant 0 : index
    %10 = vector.load %arg5[%c0_5, %c0_6, %c0_7, %c0_8] : memref<1x8x8x128xf32, #tpu.memory_space<vmem>>, vector<1x1x8x128xf32>
    %11 = vector.shape_cast %10 : vector<1x1x8x128xf32> to vector<1x8x128xf32>
    %12 = vector.shape_cast %9 : vector<1x8x128xf32> to vector<1x1x8x128xf32>
    tpu.vector_store %arg5[%c0_5, %c0_6, %c0_7, %c0_8], %12 {strides = array<i32>} : memref<1x8x8x128xf32, #tpu.memory_space<vmem>>, vector<1x1x8x128xf32>,
    %13 = arith.subf %1, %9 : vector<1x8x128xf32>
    %c0_9 = arith.constant 0 : index
    %c0_10 = arith.constant 0 : index
    %c0_11 = arith.constant 0 : index
    %14 = vector.load %arg6[%c0_9, %c0_10, %c0_11] : memref<1x8x128xf32, #tpu.memory_space<vmem>>, vector<1x8x128xf32>
    tpu.vector_store %arg6[%c0_9, %c0_10, %c0_11], %13 {strides = array<i32>} : memref<1x8x128xf32, #tpu.memory_space<vmem>>, vector<1x8x128xf32>,
    %c0_12 = arith.constant 0 : index
    %c0_13 = arith.constant 0 : index
    %c0_14 = arith.constant 0 : index
    %15 = vector.load %arg6[%c0_12, %c0_13, %c0_14] : memref<1x8x128xf32, #tpu.memory_space<vmem>>, vector<1x8x128xf32>
    %c0_15 = arith.constant 0 : index
    %c1 = arith.constant 1 : index
    %c0_16 = arith.constant 0 : index
    %c0_17 = arith.constant 0 : index
    %16 = vector.load %arg4[%c0_15, %c1, %c0_16, %c0_17] : memref<1x8x8x128xf32, #tpu.memory_space<vmem>>, vector<1x1x8x128xf32>
    %17 = vector.shape_cast %16 : vector<1x1x8x128xf32> to vector<1x8x128xf32>
    %18 = arith.addf %15, %17 : vector<1x8x128xf32>
    %c1_18 = arith.constant 1 : index
    %19 = memref.load %arg2[%c1_18] : memref<8xf32, #tpu.memory_space<smem>>
    %20 = vector.broadcast %19 : f32 to vector<1x8x128xf32>
    %21 = arith.cmpf oge, %18, %20 : vector<1x8x128xf32>
    %22 = arith.extui %21 : vector<1x8x128xi1> to vector<1x8x128xi32>
    %23 = arith.sitofp %22 : vector<1x8x128xi32> to vector<1x8x128xf32>
    %c1_19 = arith.constant 1 : index
    %24 = memref.load %arg3[%c1_19] : memref<8xf32, #tpu.memory_space<smem>>
    %25 = vector.broadcast %24 : f32 to vector<1x8x128xf32>
    %26 = arith.mulf %23, %25 : vector<1x8x128xf32>
    %c0_20 = arith.constant 0 : index
    %c1_21 = arith.constant 1 : index
    %c0_22 = arith.constant 0 : index
    %c0_23 = arith.constant 0 : index
    %27 = vector.load %arg5[%c0_20, %c1_21, %c0_22, %c0_23] : memref<1x8x8x128xf32, #tpu.memory_space<vmem>>, vector<1x1x8x128xf32>
    %28 = vector.shape_cast %27 : vector<1x1x8x128xf32> to vector<1x8x128xf32>
    %29 = vector.shape_cast %26 : vector<1x8x128xf32> to vector<1x1x8x128xf32>
    tpu.vector_store %arg5[%c0_20, %c1_21, %c0_22, %c0_23], %29 {strides = array<i32>} : memref<1x8x8x128xf32, #tpu.memory_space<vmem>>, vector<1x1x8x128xf32>,
    %30 = arith.subf %18, %26 : vector<1x8x128xf32>
    %c0_24 = arith.constant 0 : index
    %c0_25 = arith.constant 0 : index
    %c0_26 = arith.constant 0 : index
    %31 = vector.load %arg6[%c0_24, %c0_25, %c0_26] : memref<1x8x128xf32, #tpu.memory_space<vmem>>, vector<1x8x128xf32>
    tpu.vector_store %arg6[%c0_24, %c0_25, %c0_26], %30 {strides = array<i32>} : memref<1x8x128xf32, #tpu.memory_space<vmem>>, vector<1x8x128xf32>,
    %c0_27 = arith.constant 0 : index
    %c0_28 = arith.constant 0 : index
    %c0_29 = arith.constant 0 : index
    %32 = vector.load %arg6[%c0_27, %c0_28, %c0_29] : memref<1x8x128xf32, #tpu.memory_space<vmem>>, vector<1x8x128xf32>
    %c0_30 = arith.constant 0 : index
    %c2 = arith.constant 2 : index
    %c0_31 = arith.constant 0 : index
    %c0_32 = arith.constant 0 : index
    %33 = vector.load %arg4[%c0_30, %c2, %c0_31, %c0_32] : memref<1x8x8x128xf32, #tpu.memory_space<vmem>>, vector<1x1x8x128xf32>
    %34 = vector.shape_cast %33 : vector<1x1x8x128xf32> to vector<1x8x128xf32>
    %35 = arith.addf %32, %34 : vector<1x8x128xf32>
    %c2_33 = arith.constant 2 : index
    %36 = memref.load %arg2[%c2_33] : memref<8xf32, #tpu.memory_space<smem>>
    %37 = vector.broadcast %36 : f32 to vector<1x8x128xf32>
    %38 = arith.cmpf oge, %35, %37 : vector<1x8x128xf32>
    %39 = arith.extui %38 : vector<1x8x128xi1> to vector<1x8x128xi32>
    %40 = arith.sitofp %39 : vector<1x8x128xi32> to vector<1x8x128xf32>
    %c2_34 = arith.constant 2 : index
    %41 = memref.load %arg3[%c2_34] : memref<8xf32, #tpu.memory_space<smem>>
    %42 = vector.broadcast %41 : f32 to vector<1x8x128xf32>
    %43 = arith.mulf %40, %42 : vector<1x8x128xf32>
    %c0_35 = arith.constant 0 : index
    %c2_36 = arith.constant 2 : index
    %c0_37 = arith.constant 0 : index
    %c0_38 = arith.constant 0 : index
    %44 = vector.load %arg5[%c0_35, %c2_36, %c0_37, %c0_38] : memref<1x8x8x128xf32, #tpu.memory_space<vmem>>, vector<1x1x8x128xf32>
    %45 = vector.shape_cast %44 : vector<1x1x8x128xf32> to vector<1x8x128xf32>
    %46 = vector.shape_cast %43 : vector<1x8x128xf32> to vector<1x1x8x128xf32>
    tpu.vector_store %arg5[%c0_35, %c2_36, %c0_37, %c0_38], %46 {strides = array<i32>} : memref<1x8x8x128xf32, #tpu.memory_space<vmem>>, vector<1x1x8x128xf32>,
    %47 = arith.subf %35, %43 : vector<1x8x128xf32>
    %c0_39 = arith.constant 0 : index
    %c0_40 = arith.constant 0 : index
    %c0_41 = arith.constant 0 : index
    %48 = vector.load %arg6[%c0_39, %c0_40, %c0_41] : memref<1x8x128xf32, #tpu.memory_space<vmem>>, vector<1x8x128xf32>
    tpu.vector_store %arg6[%c0_39, %c0_40, %c0_41], %47 {strides = array<i32>} : memref<1x8x128xf32, #tpu.memory_space<vmem>>, vector<1x8x128xf32>,
    %c0_42 = arith.constant 0 : index
    %c0_43 = arith.constant 0 : index
    %c0_44 = arith.constant 0 : index
    %49 = vector.load %arg6[%c0_42, %c0_43, %c0_44] : memref<1x8x128xf32, #tpu.memory_space<vmem>>, vector<1x8x128xf32>
    %c0_45 = arith.constant 0 : index
    %c3 = arith.constant 3 : index
    %c0_46 = arith.constant 0 : index
    %c0_47 = arith.constant 0 : index
    %50 = vector.load %arg4[%c0_45, %c3, %c0_46, %c0_47] : memref<1x8x8x128xf32, #tpu.memory_space<vmem>>, vector<1x1x8x128xf32>
    %51 = vector.shape_cast %50 : vector<1x1x8x128xf32> to vector<1x8x128xf32>
    %52 = arith.addf %49, %51 : vector<1x8x128xf32>
    %c3_48 = arith.constant 3 : index
    %53 = memref.load %arg2[%c3_48] : memref<8xf32, #tpu.memory_space<smem>>
    %54 = vector.broadcast %53 : f32 to vector<1x8x128xf32>
    %55 = arith.cmpf oge, %52, %54 : vector<1x8x128xf32>
    %56 = arith.extui %55 : vector<1x8x128xi1> to vector<1x8x128xi32>
    %57 = arith.sitofp %56 : vector<1x8x128xi32> to vector<1x8x128xf32>
    %c3_49 = arith.constant 3 : index
    %58 = memref.load %arg3[%c3_49] : memref<8xf32, #tpu.memory_space<smem>>
    %59 = vector.broadcast %58 : f32 to vector<1x8x128xf32>
    %60 = arith.mulf %57, %59 : vector<1x8x128xf32>
    %c0_50 = arith.constant 0 : index
    %c3_51 = arith.constant 3 : index
    %c0_52 = arith.constant 0 : index
    %c0_53 = arith.constant 0 : index
    %61 = vector.load %arg5[%c0_50, %c3_51, %c0_52, %c0_53] : memref<1x8x8x128xf32, #tpu.memory_space<vmem>>, vector<1x1x8x128xf32>
    %62 = vector.shape_cast %61 : vector<1x1x8x128xf32> to vector<1x8x128xf32>
    %63 = vector.shape_cast %60 : vector<1x8x128xf32> to vector<1x1x8x128xf32>
    tpu.vector_store %arg5[%c0_50, %c3_51, %c0_52, %c0_53], %63 {strides = array<i32>} : memref<1x8x8x128xf32, #tpu.memory_space<vmem>>, vector<1x1x8x128xf32>,
    %64 = arith.subf %52, %60 : vector<1x8x128xf32>
    %c0_54 = arith.constant 0 : index
    %c0_55 = arith.constant 0 : index
    %c0_56 = arith.constant 0 : index
    %65 = vector.load %arg6[%c0_54, %c0_55, %c0_56] : memref<1x8x128xf32, #tpu.memory_space<vmem>>, vector<1x8x128xf32>
    tpu.vector_store %arg6[%c0_54, %c0_55, %c0_56], %64 {strides = array<i32>} : memref<1x8x128xf32, #tpu.memory_space<vmem>>, vector<1x8x128xf32>,
    %c0_57 = arith.constant 0 : index
    %c0_58 = arith.constant 0 : index
    %c0_59 = arith.constant 0 : index
    %66 = vector.load %arg6[%c0_57, %c0_58, %c0_59] : memref<1x8x128xf32, #tpu.memory_space<vmem>>, vector<1x8x128xf32>
    %c0_60 = arith.constant 0 : index
    %c4 = arith.constant 4 : index
    %c0_61 = arith.constant 0 : index
    %c0_62 = arith.constant 0 : index
    %67 = vector.load %arg4[%c0_60, %c4, %c0_61, %c0_62] : memref<1x8x8x128xf32, #tpu.memory_space<vmem>>, vector<1x1x8x128xf32>
    %68 = vector.shape_cast %67 : vector<1x1x8x128xf32> to vector<1x8x128xf32>
    %69 = arith.addf %66, %68 : vector<1x8x128xf32>
    %c4_63 = arith.constant 4 : index
    %70 = memref.load %arg2[%c4_63] : memref<8xf32, #tpu.memory_space<smem>>
    %71 = vector.broadcast %70 : f32 to vector<1x8x128xf32>
    %72 = arith.cmpf oge, %69, %71 : vector<1x8x128xf32>
    %73 = arith.extui %72 : vector<1x8x128xi1> to vector<1x8x128xi32>
    %74 = arith.sitofp %73 : vector<1x8x128xi32> to vector<1x8x128xf32>
    %c4_64 = arith.constant 4 : index
    %75 = memref.load %arg3[%c4_64] : memref<8xf32, #tpu.memory_space<smem>>
    %76 = vector.broadcast %75 : f32 to vector<1x8x128xf32>
    %77 = arith.mulf %74, %76 : vector<1x8x128xf32>
    %c0_65 = arith.constant 0 : index
    %c4_66 = arith.constant 4 : index
    %c0_67 = arith.constant 0 : index
    %c0_68 = arith.constant 0 : index
    %78 = vector.load %arg5[%c0_65, %c4_66, %c0_67, %c0_68] : memref<1x8x8x128xf32, #tpu.memory_space<vmem>>, vector<1x1x8x128xf32>
    %79 = vector.shape_cast %78 : vector<1x1x8x128xf32> to vector<1x8x128xf32>
    %80 = vector.shape_cast %77 : vector<1x8x128xf32> to vector<1x1x8x128xf32>
    tpu.vector_store %arg5[%c0_65, %c4_66, %c0_67, %c0_68], %80 {strides = array<i32>} : memref<1x8x8x128xf32, #tpu.memory_space<vmem>>, vector<1x1x8x128xf32>,
    %81 = arith.subf %69, %77 : vector<1x8x128xf32>
    %c0_69 = arith.constant 0 : index
    %c0_70 = arith.constant 0 : index
    %c0_71 = arith.constant 0 : index
    %82 = vector.load %arg6[%c0_69, %c0_70, %c0_71] : memref<1x8x128xf32, #tpu.memory_space<vmem>>, vector<1x8x128xf32>
    tpu.vector_store %arg6[%c0_69, %c0_70, %c0_71], %81 {strides = array<i32>} : memref<1x8x128xf32, #tpu.memory_space<vmem>>, vector<1x8x128xf32>,
    %c0_72 = arith.constant 0 : index
    %c0_73 = arith.constant 0 : index
    %c0_74 = arith.constant 0 : index
    %83 = vector.load %arg6[%c0_72, %c0_73, %c0_74] : memref<1x8x128xf32, #tpu.memory_space<vmem>>, vector<1x8x128xf32>
    %c0_75 = arith.constant 0 : index
    %c5 = arith.constant 5 : index
    %c0_76 = arith.constant 0 : index
    %c0_77 = arith.constant 0 : index
    %84 = vector.load %arg4[%c0_75, %c5, %c0_76, %c0_77] : memref<1x8x8x128xf32, #tpu.memory_space<vmem>>, vector<1x1x8x128xf32>
    %85 = vector.shape_cast %84 : vector<1x1x8x128xf32> to vector<1x8x128xf32>
    %86 = arith.addf %83, %85 : vector<1x8x128xf32>
    %c5_78 = arith.constant 5 : index
    %87 = memref.load %arg2[%c5_78] : memref<8xf32, #tpu.memory_space<smem>>
    %88 = vector.broadcast %87 : f32 to vector<1x8x128xf32>
    %89 = arith.cmpf oge, %86, %88 : vector<1x8x128xf32>
    %90 = arith.extui %89 : vector<1x8x128xi1> to vector<1x8x128xi32>
    %91 = arith.sitofp %90 : vector<1x8x128xi32> to vector<1x8x128xf32>
    %c5_79 = arith.constant 5 : index
    %92 = memref.load %arg3[%c5_79] : memref<8xf32, #tpu.memory_space<smem>>
    %93 = vector.broadcast %92 : f32 to vector<1x8x128xf32>
    %94 = arith.mulf %91, %93 : vector<1x8x128xf32>
    %c0_80 = arith.constant 0 : index
    %c5_81 = arith.constant 5 : index
    %c0_82 = arith.constant 0 : index
    %c0_83 = arith.constant 0 : index
    %95 = vector.load %arg5[%c0_80, %c5_81, %c0_82, %c0_83] : memref<1x8x8x128xf32, #tpu.memory_space<vmem>>, vector<1x1x8x128xf32>
    %96 = vector.shape_cast %95 : vector<1x1x8x128xf32> to vector<1x8x128xf32>
    %97 = vector.shape_cast %94 : vector<1x8x128xf32> to vector<1x1x8x128xf32>
    tpu.vector_store %arg5[%c0_80, %c5_81, %c0_82, %c0_83], %97 {strides = array<i32>} : memref<1x8x8x128xf32, #tpu.memory_space<vmem>>, vector<1x1x8x128xf32>,
    %98 = arith.subf %86, %94 : vector<1x8x128xf32>
    %c0_84 = arith.constant 0 : index
    %c0_85 = arith.constant 0 : index
    %c0_86 = arith.constant 0 : index
    %99 = vector.load %arg6[%c0_84, %c0_85, %c0_86] : memref<1x8x128xf32, #tpu.memory_space<vmem>>, vector<1x8x128xf32>
    tpu.vector_store %arg6[%c0_84, %c0_85, %c0_86], %98 {strides = array<i32>} : memref<1x8x128xf32, #tpu.memory_space<vmem>>, vector<1x8x128xf32>,
    %c0_87 = arith.constant 0 : index
    %c0_88 = arith.constant 0 : index
    %c0_89 = arith.constant 0 : index
    %100 = vector.load %arg6[%c0_87, %c0_88, %c0_89] : memref<1x8x128xf32, #tpu.memory_space<vmem>>, vector<1x8x128xf32>
    %c0_90 = arith.constant 0 : index
    %c6 = arith.constant 6 : index
    %c0_91 = arith.constant 0 : index
    %c0_92 = arith.constant 0 : index
    %101 = vector.load %arg4[%c0_90, %c6, %c0_91, %c0_92] : memref<1x8x8x128xf32, #tpu.memory_space<vmem>>, vector<1x1x8x128xf32>
    %102 = vector.shape_cast %101 : vector<1x1x8x128xf32> to vector<1x8x128xf32>
    %103 = arith.addf %100, %102 : vector<1x8x128xf32>
    %c6_93 = arith.constant 6 : index
    %104 = memref.load %arg2[%c6_93] : memref<8xf32, #tpu.memory_space<smem>>
    %105 = vector.broadcast %104 : f32 to vector<1x8x128xf32>
    %106 = arith.cmpf oge, %103, %105 : vector<1x8x128xf32>
    %107 = arith.extui %106 : vector<1x8x128xi1> to vector<1x8x128xi32>
    %108 = arith.sitofp %107 : vector<1x8x128xi32> to vector<1x8x128xf32>
    %c6_94 = arith.constant 6 : index
    %109 = memref.load %arg3[%c6_94] : memref<8xf32, #tpu.memory_space<smem>>
    %110 = vector.broadcast %109 : f32 to vector<1x8x128xf32>
    %111 = arith.mulf %108, %110 : vector<1x8x128xf32>
    %c0_95 = arith.constant 0 : index
    %c6_96 = arith.constant 6 : index
    %c0_97 = arith.constant 0 : index
    %c0_98 = arith.constant 0 : index
    %112 = vector.load %arg5[%c0_95, %c6_96, %c0_97, %c0_98] : memref<1x8x8x128xf32, #tpu.memory_space<vmem>>, vector<1x1x8x128xf32>
    %113 = vector.shape_cast %112 : vector<1x1x8x128xf32> to vector<1x8x128xf32>
    %114 = vector.shape_cast %111 : vector<1x8x128xf32> to vector<1x1x8x128xf32>
    tpu.vector_store %arg5[%c0_95, %c6_96, %c0_97, %c0_98], %114 {strides = array<i32>} : memref<1x8x8x128xf32, #tpu.memory_space<vmem>>, vector<1x1x8x128xf32>,
    %115 = arith.subf %103, %111 : vector<1x8x128xf32>
    %c0_99 = arith.constant 0 : index
    %c0_100 = arith.constant 0 : index
    %c0_101 = arith.constant 0 : index
    %116 = vector.load %arg6[%c0_99, %c0_100, %c0_101] : memref<1x8x128xf32, #tpu.memory_space<vmem>>, vector<1x8x128xf32>
    tpu.vector_store %arg6[%c0_99, %c0_100, %c0_101], %115 {strides = array<i32>} : memref<1x8x128xf32, #tpu.memory_space<vmem>>, vector<1x8x128xf32>,
    %c0_102 = arith.constant 0 : index
    %c0_103 = arith.constant 0 : index
    %c0_104 = arith.constant 0 : index
    %117 = vector.load %arg6[%c0_102, %c0_103, %c0_104] : memref<1x8x128xf32, #tpu.memory_space<vmem>>, vector<1x8x128xf32>
    %c0_105 = arith.constant 0 : index
    %c7 = arith.constant 7 : index
    %c0_106 = arith.constant 0 : index
    %c0_107 = arith.constant 0 : index
    %118 = vector.load %arg4[%c0_105, %c7, %c0_106, %c0_107] : memref<1x8x8x128xf32, #tpu.memory_space<vmem>>, vector<1x1x8x128xf32>
    %119 = vector.shape_cast %118 : vector<1x1x8x128xf32> to vector<1x8x128xf32>
    %120 = arith.addf %117, %119 : vector<1x8x128xf32>
    %c7_108 = arith.constant 7 : index
    %121 = memref.load %arg2[%c7_108] : memref<8xf32, #tpu.memory_space<smem>>
    %122 = vector.broadcast %121 : f32 to vector<1x8x128xf32>
    %123 = arith.cmpf oge, %120, %122 : vector<1x8x128xf32>
    %124 = arith.extui %123 : vector<1x8x128xi1> to vector<1x8x128xi32>
    %125 = arith.sitofp %124 : vector<1x8x128xi32> to vector<1x8x128xf32>
    %c7_109 = arith.constant 7 : index
    %126 = memref.load %arg3[%c7_109] : memref<8xf32, #tpu.memory_space<smem>>
    %127 = vector.broadcast %126 : f32 to vector<1x8x128xf32>
    %128 = arith.mulf %125, %127 : vector<1x8x128xf32>
    %c0_110 = arith.constant 0 : index
    %c7_111 = arith.constant 7 : index
    %c0_112 = arith.constant 0 : index
    %c0_113 = arith.constant 0 : index
    %129 = vector.load %arg5[%c0_110, %c7_111, %c0_112, %c0_113] : memref<1x8x8x128xf32, #tpu.memory_space<vmem>>, vector<1x1x8x128xf32>
    %130 = vector.shape_cast %129 : vector<1x1x8x128xf32> to vector<1x8x128xf32>
    %131 = vector.shape_cast %128 : vector<1x8x128xf32> to vector<1x1x8x128xf32>
    tpu.vector_store %arg5[%c0_110, %c7_111, %c0_112, %c0_113], %131 {strides = array<i32>} : memref<1x8x8x128xf32, #tpu.memory_space<vmem>>, vector<1x1x8x128xf32>,
    %132 = arith.subf %120, %128 : vector<1x8x128xf32>
    %c0_114 = arith.constant 0 : index
    %c0_115 = arith.constant 0 : index
    %c0_116 = arith.constant 0 : index
    %133 = vector.load %arg6[%c0_114, %c0_115, %c0_116] : memref<1x8x128xf32, #tpu.memory_space<vmem>>, vector<1x8x128xf32>
    tpu.vector_store %arg6[%c0_114, %c0_115, %c0_116], %132 {strides = array<i32>} : memref<1x8x128xf32, #tpu.memory_space<vmem>>, vector<1x8x128xf32>,
    return
  }
  func.func @transform_0(%arg0: i32, %arg1: i32) -> i32 {
    %c0_i32 = arith.constant 0 : i32
    %c0_i32_0 = arith.constant 0 : i32
    return %c0_i32 : i32
  }
  func.func @transform_1(%arg0: i32, %arg1: i32) -> i32 {
    %c0_i32 = arith.constant 0 : i32
    %c0_i32_0 = arith.constant 0 : i32
    return %c0_i32 : i32
  }
  func.func @transform_2(%arg0: i32, %arg1: i32) -> (i32, i32, i32, i32) {
    %c0_i32 = arith.constant 0 : i32
    %c0_i32_0 = arith.constant 0 : i32
    %c0_i32_1 = arith.constant 0 : i32
    return %arg0, %c0_i32, %arg1, %c0_i32_0 : i32, i32, i32, i32
  }
  func.func @transform_3(%arg0: i32, %arg1: i32) -> (i32, i32, i32, i32) {
    %c0_i32 = arith.constant 0 : i32
    %c0_i32_0 = arith.constant 0 : i32
    %c0_i32_1 = arith.constant 0 : i32
    return %arg0, %c0_i32, %arg1, %c0_i32_0 : i32, i32, i32, i32
  }
}

</mosaic_0001>

<llo_original>
// kernel: _spike_core.1
$region0: #{_spike_core.1}
  #allocation0 [shape = 'u32[]', space=smem, size = 0x4, offset = 0x4, fixed_abs, tag = 'smem constant byte address 0x4 - core index']
  #allocation1 [shape = 'u32[72,128]{1,0:T(1,128)}', space=vmem, size = 0x9000, scoped, tag = 'internal scratch']
  #allocation2 [shape = 'f32[1,8,128]{2,1,0:T(8,128)}', space=vmem, size = 0x1000, scoped, tag = 'scratch operand']
  %s0 = inlined_call_operand.vmem [shape: f32[8], index: 0, kind: input, shape index: {}]
  %s1 = inlined_call_operand.vmem [shape: f32[8], index: 1, kind: input, shape index: {}]
  %s2 = inlined_call_operand.vmem [shape: f32[2,8,8,128], index: 2, kind: input, shape index: {}]
  %s3 = inlined_call_operand.vmem [shape: f32[2,8,8,128], index: 3, kind: output, shape index: {}]
  %s4 = sld [smem:[#allocation0]]
  $region53: #{_spike_core.1} parent=0
    _
  %s6 = ssub.s32 1, %s4
  %s7 = scalar_select 0, %s6, %s4
  $region1: #{_spike_core.1} parent=0
    #allocation3 [shape = 'u8[512]{0}', space=smem, size = 0x200, scoped, tag = 'input window, operand 0, single buffered']
    #allocation4 [shape = 's32[2]{0}', space=sflag, size = 0x8, scoped, tag = 'scoped memory for _spike_core.1']
    #allocation5 [shape = 'u8[512]{0}', space=smem, size = 0x200, scoped, tag = 'input window, operand 1, single buffered']
    #allocation6 [shape = 's32[1]{0}', space=sflag, size = 0x4, scoped, tag = 'scoped memory for _spike_core.1']
    %8 = vsyncpa [#allocation4], 0
    %9 = vsyncpa [#allocation6], 0
    loop: start=0, step=1, limit=4
    $region2: #{_spike_core.1} parent=1 // loop_pre_header
      _
    $region3: #{_spike_core.1} parent=1 // loop_header
      %s11 = sphi 0, %s15
      %p12 = scmp.ge.s32.totalorder %s11, 4
      %s18 = sphi 0, %s30
      %s19 = sphi 0, %s26
      %s20 = sphi 0, %s18
      %s21 = sphi 0, %s19
      %s22 = sphi 0, %s20
      %s23 = sphi 0, %s21
      %s31 = sphi 0, %s31
      %s33 = sphi 0, %s31
      %s34 = sphi 0, %s33
      %s48 = sphi 0, %s34
      %s52 = sphi 0, %s52
      %s54 = sphi 0, %s52
      %s55 = sphi 0, %s54
      %s69 = sphi 0, %s55
      %s77 = sphi 0, %s79
      %s80 = sphi 0, %s77
      %s81 = sphi 0, %s80
      %s97 = sphi 0, %s81
      %s105 = sphi 0, %s107
      %s108 = sphi 0, %s105
      %s109 = sphi 0, %s108
      %s125 = sphi 0, %s109
    $region4: #{_spike_core.1} parent=1 // loop_header_branch
      %14 = sbr.rel (%p12) target = $region8
    $region5: #{_spike_core.1} parent=1 // loop_body
      %s16 = ssub.s32 %s11, 1
      %s17 = ssub.s32 %s11, 2
      %s24 = sadd.s32 1, %s19
      %p25 = scmp.ge.s32.totalorder %s24, 1
      %s26 = scalar_select %p25, 0, %s24
      %s27 = sadd.s32 1, %s18
      %s28 = scalar_select %p25, %s27, %s18
      %p29 = scmp.ge.s32.totalorder %s28, 2
      %s30 = scalar_select %p29, 0, %s28
      %s32 = sadd.s32 %s31, 1
      %p35 = scmp.eq.s32.totalorder %s11, 1
      %p36 = scmp.ne.s32.totalorder %s31, %s33
      %p37 = scmp.eq.s32.totalorder %s11, 0
      %p38 = por %p36, %p37
      %p39 = scmp.ne.s32.totalorder %s31, %s33
      %p40 = scmp.eq.s32.totalorder %s16, 1
      %p41 = por %p39, %p40
      %p42 = scmp.ne.s32.totalorder %s33, %s34
      %p43 = scmp.eq.s32.totalorder %s16, 0
      %p44 = por %p42, %p43
      %p45 = scmp.ne.s32.totalorder %s33, %s34
      %p46 = scmp.eq.s32.totalorder %s17, 1
      %p47 = por %p45, %p46
      %p49 = scmp.ne.s32.totalorder %s34, %s48
      %p50 = scmp.eq.s32.totalorder %s17, 0
      %p51 = por %p49, %p50
      %s53 = sadd.s32 %s52, 1
      %p56 = scmp.eq.s32.totalorder %s11, 1
      %p57 = scmp.ne.s32.totalorder %s52, %s54
      %p58 = scmp.eq.s32.totalorder %s11, 0
      %p59 = por %p57, %p58
      %p60 = scmp.ne.s32.totalorder %s52, %s54
      %p61 = scmp.eq.s32.totalorder %s16, 1
      %p62 = por %p60, %p61
      %p63 = scmp.ne.s32.totalorder %s54, %s55
      %p64 = scmp.eq.s32.totalorder %s16, 0
      %p65 = por %p63, %p64
      %p66 = scmp.ne.s32.totalorder %s54, %s55
      %p67 = scmp.eq.s32.totalorder %s17, 1
      %p68 = por %p66, %p67
      %p70 = scmp.ne.s32.totalorder %s55, %s69
      %p71 = scmp.eq.s32.totalorder %s17, 0
      %p72 = por %p70, %p71
      %s73 = ssub.s32 %s18, %s30
      %s74 = ssub.s32 %s19, %s26
      %s75 = sor.u32 %s73, %s74
      %p76 = scmp.eq.s32.totalorder %s75, 0
      %s78 = sadd.s32 %s77, 1
      %s79 = scalar_select %p76, %s77, %s78
      %p82 = pneg %p76
      %p83 = scmp.eq.s32.totalorder %s11, 1
      %p84 = por %p82, %p83
      %p85 = scmp.ne.s32.totalorder %s77, %s80
      %p86 = scmp.eq.s32.totalorder %s11, 0
      %p87 = por %p85, %p86
      %p88 = scmp.ne.s32.totalorder %s77, %s80
      %p89 = scmp.eq.s32.totalorder %s16, 1
      %p90 = por %p88, %p89
      %p91 = scmp.ne.s32.totalorder %s80, %s81
      %p92 = scmp.eq.s32.totalorder %s16, 0
      %p93 = por %p91, %p92
      %p94 = scmp.ne.s32.totalorder %s80, %s81
      %p95 = scmp.eq.s32.totalorder %s17, 1
      %p96 = por %p94, %p95
      %p98 = scmp.ne.s32.totalorder %s81, %s97
      %p99 = scmp.eq.s32.totalorder %s17, 0
      %p100 = por %p98, %p99
      %s101 = ssub.s32 %s18, %s30
      %s102 = ssub.s32 %s19, %s26
      %s103 = sor.u32 %s101, %s102
      %p104 = scmp.eq.s32.totalorder %s103, 0
      %s106 = sadd.s32 %s105, 1
      %s107 = scalar_select %p104, %s105, %s106
      %p110 = pneg %p104
      %p111 = scmp.eq.s32.totalorder %s11, 1
      %p112 = por %p110, %p111
      %p113 = scmp.ne.s32.totalorder %s105, %s108
      %p114 = scmp.eq.s32.totalorder %s11, 0
      %p115 = por %p113, %p114
      %p116 = scmp.ne.s32.totalorder %s105, %s108
      %p117 = scmp.eq.s32.totalorder %s16, 1
      %p118 = por %p116, %p117
      %p119 = scmp.ne.s32.totalorder %s108, %s109
      %p120 = scmp.eq.s32.totalorder %s16, 0
      %p121 = por %p119, %p120
      %p122 = scmp.ne.s32.totalorder %s108, %s109
      %p123 = scmp.eq.s32.totalorder %s17, 1
      %p124 = por %p122, %p123
      %p126 = scmp.ne.s32.totalorder %s109, %s125
      %p127 = scmp.eq.s32.totalorder %s17, 0
      %p128 = por %p126, %p127
      %p129 = scmp.le.s32.totalorder 1, %s11
      %p130 = scmp.lt.s32.totalorder %s11, 3
      %p131 = pnand %p129, %p130
      %p132 = pneg %p131
      // Predicated region
      $region9: #{_spike_core.1} parent=5 // pred_check
        _
      $region10: #{_spike_core.1} parent=5 // pred_check_branch
        %134 = sbr.rel (%p131) target = $region12
      $region11: #{_spike_core.1} parent=5 // pred_region
        %s135 = ssub.s32 %s11, 1
        // Predicated region
        $region13: #{_spike_core.1} parent=11 // pred_check
          %p136 = pneg %p44
        $region14: #{_spike_core.1} parent=11 // pred_check_branch
          %138 = sbr.rel (%p136) target = $region16
        $region15: #{_spike_core.1} parent=11 // pred_region
          %140 = vsyncadd [#allocation4], 0
          %s142 = sshll.u32 %s0, 4
          %s143 = int_to_ptr.vmem [resolvable:$true] %s142
          %145 = dma.vmem_to_smem %s143, 16, [#allocation3], [#allocation4]
        $region16: #{_spike_core.1} parent=11 // pred_fallthru
          _
        // Predicated region
        $region17: #{_spike_core.1} parent=11 // pred_check
          %p146 = pneg %p65
        $region18: #{_spike_core.1} parent=11 // pred_check_branch
          %148 = sbr.rel (%p146) target = $region20
        $region19: #{_spike_core.1} parent=11 // pred_region
          %150 = vsyncadd [#allocation6], 0
          %s152 = sshll.u32 %s1, 4
          %s153 = int_to_ptr.vmem [resolvable:$true] %s152
          %155 = dma.vmem_to_smem %s153, 16, [#allocation5], [#allocation6]
        $region20: #{_spike_core.1} parent=11 // pred_fallthru
          _
      $region12: #{_spike_core.1} parent=5 // pred_fallthru
        _
      %p156 = scmp.lt.s32.totalorder %s11, 2
      // Predicated region
      $region21: #{_spike_core.1} parent=5 // pred_check
        %p157 = pneg %p156
      $region22: #{_spike_core.1} parent=5 // pred_check_branch
        %159 = sbr.rel (%p157) target = $region24
      $region23: #{_spike_core.1} parent=5 // pred_region
        // Predicated region
        $region25: #{_spike_core.1} parent=23 // pred_check
          %p160 = pneg %p87
        $region26: #{_spike_core.1} parent=23 // pred_check_branch
          %162 = sbr.rel (%p160) target = $region28
        $region27: #{_spike_core.1} parent=23 // pred_region
          %p163 = scmp.lt.s32.totalorder %s18, 1
          %s164 = scalar_select %p163, %s18, 1
          %p165 = scmp.lt.s32.totalorder %s19, 0
          %s166 = scalar_select %p165, %s19, 0
          %s167 = smul.addr %s164, 8
          %s168 = sadd.s32 %s166, %s167
          %s169 = smul.addr %s168, 8
          %s170 = scalar_lea.vmem %s2, %s169
        $region28: #{_spike_core.1} parent=23 // pred_fallthru
          _
      $region24: #{_spike_core.1} parent=5 // pred_fallthru
        _
      %p171 = scmp.le.s32.totalorder 1, %s11
      %p172 = scmp.lt.s32.totalorder %s11, 3
      %p173 = pnand %p171, %p172
      %p174 = pneg %p173
      // Predicated region
      $region29: #{_spike_core.1} parent=5 // pred_check
        _
      $region30: #{_spike_core.1} parent=5 // pred_check_branch
        %176 = sbr.rel (%p173) target = $region32
      $region31: #{_spike_core.1} parent=5 // pred_region
        %s177 = ssub.s32 %s11, 1
        // Predicated region
        $region33: #{_spike_core.1} parent=31 // pred_check
          %p178 = pneg %p44
        $region34: #{_spike_core.1} parent=31 // pred_check_branch
          %180 = sbr.rel (%p178) target = $region36
        $region35: #{_spike_core.1} parent=31 // pred_region
          %182 = dma.done [#allocation4], 16
        $region36: #{_spike_core.1} parent=31 // pred_fallthru
          _
        // Predicated region
        $region37: #{_spike_core.1} parent=31 // pred_check
          %p183 = pneg %p65
        $region38: #{_spike_core.1} parent=31 // pred_check_branch
          %185 = sbr.rel (%p183) target = $region40
        $region39: #{_spike_core.1} parent=31 // pred_region
          %187 = dma.done [#allocation6], 16
        $region40: #{_spike_core.1} parent=31 // pred_fallthru
          _
        %188 = sfence
        %p189 = pneg %p44
        %p190 = pneg %p41
        %p191 = pneg %p65
        %p192 = pneg %p62
        %p193 = scmp.lt.s32.totalorder %s20, 1
        %s194 = scalar_select %p193, %s20, 1
        %p195 = scmp.lt.s32.totalorder %s21, 0
        %s196 = scalar_select %p195, %s21, 0
        %s197 = smul.addr %s194, 8
        %s198 = sadd.s32 %s196, %s197
        %s199 = smul.addr %s198, 8
        %s200 = scalar_lea.vmem %s2, %s199
        %p201 = pneg %p93
        %p202 = pneg %p90
        %p203 = pneg %p121
        %p204 = pneg %p118
        %p205 = scmp.lt.s32.totalorder %s20, 1
        %s206 = scalar_select %p205, %s20, 1
        %p207 = scmp.lt.s32.totalorder %s21, 0
        %s208 = scalar_select %p207, %s21, 0
        %s209 = smul.addr %s206, 8
        %s210 = sadd.s32 %s208, %s209
        %s211 = smul.addr %s210, 8
        %s212 = scalar_lea.vmem %s3, %s211
        %p213 = scmp.lt.s32.totalorder %s20, 1
        %s214 = scalar_select %p213, %s20, 1
        %p215 = scmp.lt.s32.totalorder %s21, 0
        %s216 = scalar_select %p215, %s21, 0
        %s217 = smul.addr %s214, 8
        %s218 = sadd.s32 %s216, %s217
        %s219 = smul.addr %s218, 8
        %s220 = scalar_lea.vmem %s2, %s219
        %p221 = scmp.lt.s32.totalorder %s20, 1
        %s222 = scalar_select %p221, %s20, 1
        %p223 = scmp.lt.s32.totalorder %s21, 0
        %s224 = scalar_select %p223, %s21, 0
        %s225 = smul.addr %s222, 8
        %s226 = sadd.s32 %s224, %s225
        %s227 = smul.addr %s226, 8
        %s228 = scalar_lea.vmem %s3, %s227
        %v229 = vld [vmem:[%s220] sm:$0xff]
        %s230 = sld [smem:[#allocation3]]
        %v231 = vstv %s230
        %vm232 = vcmp.ge.f32.partialorder %v229, %v231
        %v233 = vsel %vm232, 1, 0
        %v234 = vcvt.s32.f32 %v233
        %s235 = sld [smem:[#allocation5]]
        %v236 = vstv %s235
        %v237 = vmul.f32 %v234, %v236
        %238 = vst [vmem:[%s228] sm:$0xff] %v237
        %v239 = vsub.f32 %v229, %v237
        %240 = vst [vmem:[#allocation2] sm:$0xff] %v239
        %v241 = vld [vmem:[#allocation2] sm:$0xff]
        %s242 = scalar_lea.vmem %s220, 8
        %v243 = vld [vmem:[%s242] sm:$0xff]
        %v244 = vadd.f32 %v241, %v243
        %s245 = sld [smem:[#allocation3 + $0x1]]
        %v246 = vstv %s245
        %vm247 = vcmp.ge.f32.partialorder %v244, %v246
        %v248 = vsel %vm247, 1, 0
        %v249 = vcvt.s32.f32 %v248
        %s250 = sld [smem:[#allocation5 + $0x1]]
        %v251 = vstv %s250
        %v252 = vmul.f32 %v249, %v251
        %s253 = scalar_lea.vmem %s228, 8
        %254 = vst [vmem:[%s253] sm:$0xff] %v252
        %v255 = vsub.f32 %v244, %v252
        %256 = vst [vmem:[#allocation2] sm:$0xff] %v255
        %v257 = vld [vmem:[#allocation2] sm:$0xff]
        %s258 = scalar_lea.vmem %s220, 16
        %v259 = vld [vmem:[%s258] sm:$0xff]
        %v260 = vadd.f32 %v257, %v259
        %s261 = sld [smem:[#allocation3 + $0x2]]
        %v262 = vstv %s261
        %vm263 = vcmp.ge.f32.partialorder %v260, %v262
        %v264 = vsel %vm263, 1, 0
        %v265 = vcvt.s32.f32 %v264
        %s266 = sld [smem:[#allocation5 + $0x2]]
        %v267 = vstv %s266
        %v268 = vmul.f32 %v265, %v267
        %s269 = scalar_lea.vmem %s228, 16
        %270 = vst [vmem:[%s269] sm:$0xff] %v268
        %v271 = vsub.f32 %v260, %v268
        %272 = vst [vmem:[#allocation2] sm:$0xff] %v271
        %v273 = vld [vmem:[#allocation2] sm:$0xff]
        %s274 = scalar_lea.vmem %s220, 24
        %v275 = vld [vmem:[%s274] sm:$0xff]
        %v276 = vadd.f32 %v273, %v275
        %s277 = sld [smem:[#allocation3 + $0x3]]
        %v278 = vstv %s277
        %vm279 = vcmp.ge.f32.partialorder %v276, %v278
        %v280 = vsel %vm279, 1, 0
        %v281 = vcvt.s32.f32 %v280
        %s282 = sld [smem:[#allocation5 + $0x3]]
        %v283 = vstv %s282
        %v284 = vmul.f32 %v281, %v283
        %s285 = scalar_lea.vmem %s228, 24
        %286 = vst [vmem:[%s285] sm:$0xff] %v284
        %v287 = vsub.f32 %v276, %v284
        %288 = vst [vmem:[#allocation2] sm:$0xff] %v287
        %v289 = vld [vmem:[#allocation2] sm:$0xff]
        %s290 = scalar_lea.vmem %s220, 32
        %v291 = vld [vmem:[%s290] sm:$0xff]
        %v292 = vadd.f32 %v289, %v291
        %s293 = sld [smem:[#allocation3 + $0x4]]
        %v294 = vstv %s293
        %vm295 = vcmp.ge.f32.partialorder %v292, %v294
        %v296 = vsel %vm295, 1, 0
        %v297 = vcvt.s32.f32 %v296
        %s298 = sld [smem:[#allocation5 + $0x4]]
        %v299 = vstv %s298
        %v300 = vmul.f32 %v297, %v299
        %s301 = scalar_lea.vmem %s228, 32
        %302 = vst [vmem:[%s301] sm:$0xff] %v300
        %v303 = vsub.f32 %v292, %v300
        %304 = vst [vmem:[#allocation2] sm:$0xff] %v303
        %v305 = vld [vmem:[#allocation2] sm:$0xff]
        %s306 = scalar_lea.vmem %s220, 40
        %v307 = vld [vmem:[%s306] sm:$0xff]
        %v308 = vadd.f32 %v305, %v307
        %s309 = sld [smem:[#allocation3 + $0x5]]
        %v310 = vstv %s309
        %vm311 = vcmp.ge.f32.partialorder %v308, %v310
        %v312 = vsel %vm311, 1, 0
        %v313 = vcvt.s32.f32 %v312
        %s314 = sld [smem:[#allocation5 + $0x5]]
        %v315 = vstv %s314
        %v316 = vmul.f32 %v313, %v315
        %s317 = scalar_lea.vmem %s228, 40
        %318 = vst [vmem:[%s317] sm:$0xff] %v316
        %v319 = vsub.f32 %v308, %v316
        %320 = vst [vmem:[#allocation2] sm:$0xff] %v319
        %v321 = vld [vmem:[#allocation2] sm:$0xff]
        %s322 = scalar_lea.vmem %s220, 48
        %v323 = vld [vmem:[%s322] sm:$0xff]
        %v324 = vadd.f32 %v321, %v323
        %s325 = sld [smem:[#allocation3 + $0x6]]
        %v326 = vstv %s325
        %vm327 = vcmp.ge.f32.partialorder %v324, %v326
        %v328 = vsel %vm327, 1, 0
        %v329 = vcvt.s32.f32 %v328
        %s330 = sld [smem:[#allocation5 + $0x6]]
        %v331 = vstv %s330
        %v332 = vmul.f32 %v329, %v331
        %s333 = scalar_lea.vmem %s228, 48
        %334 = vst [vmem:[%s333] sm:$0xff] %v332
        %v335 = vsub.f32 %v324, %v332
        %336 = vst [vmem:[#allocation2] sm:$0xff] %v335
        %v337 = vld [vmem:[#allocation2] sm:$0xff]
        %s338 = scalar_lea.vmem %s220, 56
        %v339 = vld [vmem:[%s338] sm:$0xff]
        %v340 = vadd.f32 %v337, %v339
        %s341 = sld [smem:[#allocation3 + $0x7]]
        %v342 = vstv %s341
        %vm343 = vcmp.ge.f32.partialorder %v340, %v342
        %v344 = vsel %vm343, 1, 0
        %v345 = vcvt.s32.f32 %v344
        %s346 = sld [smem:[#allocation5 + $0x7]]
        %v347 = vstv %s346
        %v348 = vmul.f32 %v345, %v347
        %s349 = scalar_lea.vmem %s228, 56
        %350 = vst [vmem:[%s349] sm:$0xff] %v348
        %v351 = vsub.f32 %v340, %v348
        %352 = vst [vmem:[#allocation2] sm:$0xff] %v351
        %p353 = scmp.lt.s32.totalorder %s20, 1
        %s354 = scalar_select %p353, %s20, 1
        %p355 = scmp.lt.s32.totalorder %s21, 0
        %s356 = scalar_select %p355, %s21, 0
        %s357 = smul.addr %s354, 8
        %s358 = sadd.s32 %s356, %s357
        %s359 = smul.addr %s358, 8
        %s360 = scalar_lea.vmem %s3, %s359
        // Predicated region
        $region41: #{_spike_core.1} parent=31 // pred_check
          %p361 = pneg %p118
        $region42: #{_spike_core.1} parent=31 // pred_check_branch
          %363 = sbr.rel (%p361) target = $region44
        $region43: #{_spike_core.1} parent=31 // pred_region
          _
        $region44: #{_spike_core.1} parent=31 // pred_fallthru
          _
      $region32: #{_spike_core.1} parent=5 // pred_fallthru
        _
      %p364 = scmp.le.s32.totalorder 2, %s11
      // Predicated region
      $region45: #{_spike_core.1} parent=5 // pred_check
        %p365 = pneg %p364
      $region46: #{_spike_core.1} parent=5 // pred_check_branch
        %367 = sbr.rel (%p365) target = $region48
      $region47: #{_spike_core.1} parent=5 // pred_region
        %s368 = ssub.s32 %s11, 2
        // Predicated region
        $region49: #{_spike_core.1} parent=47 // pred_check
          %p369 = pneg %p124
        $region50: #{_spike_core.1} parent=47 // pred_check_branch
          %371 = sbr.rel (%p369) target = $region52
        $region51: #{_spike_core.1} parent=47 // pred_region
          %p372 = scmp.lt.s32.totalorder %s22, 1
          %s373 = scalar_select %p372, %s22, 1
          %p374 = scmp.lt.s32.totalorder %s23, 0
          %s375 = scalar_select %p374, %s23, 0
          %s376 = smul.addr %s373, 8
          %s377 = sadd.s32 %s375, %s376
          %s378 = smul.addr %s377, 8
          %s379 = scalar_lea.vmem %s3, %s378
        $region52: #{_spike_core.1} parent=47 // pred_fallthru
          _
      $region48: #{_spike_core.1} parent=5 // pred_fallthru
        _
    $region6: #{_spike_core.1} parent=1 // loop_footer
      %s15 = sadd.s32 1, %s11
    $region7: #{_spike_core.1} parent=1 // loop_footer_branch
      %10 = sbr.rel target = $region3
    $region8: #{_spike_core.1} parent=1 // loop_exit
      _
    %380 = vsyncpa [#allocation4], 1
    %s381 = scalar_lea.sflag [#allocation4], 1
    %382 = vsyncpa %s381, 1
    %383 = vsyncpa [#allocation6], 1

</llo_original>
